<compile_context>
chip_gen: v6e
topology: v6e:2x2x1
jax: 0.10.0
libtpu: 0.0.40
codegen_flags: <defaults>
</compile_context>

<pallas_src>
import functools
import math

import jax
import jax.numpy as jnp
from jax import lax
from jax.experimental import pallas as pl
from jax.experimental.pallas import tpu as pltpu


def _gss_kernel(points_ref, w_ref, bias_ref, gumbel_ref, out_ref,
                m_ref, l_ref, acc_ref, *, inv_tau, hard):
    """One (batch b, point-tile n) grid step.

    points_ref: (1, D, TN)   native dtype
    w_ref:      (S, D)       conv weight (kernel_size=1)
    bias_ref:   (S, 1)       conv bias
    gumbel_ref: (1, S, TN)   pre-sampled Gumbel(0,1) noise, f32
    out_ref:    (1, D, S)    resident across the point axis (written on last tile)
    scratch:    m (S,1), l (S,1), acc (D,S)  -- all f32
    """
    n_id = pl.program_id(1)
    n_last = pl.num_programs(1) - 1

    @pl.when(n_id == 0)
    def _init():
        m_ref[...] = jnp.full_like(m_ref, -jnp.inf)
        l_ref[...] = jnp.zeros_like(l_ref)
        acc_ref[...] = jnp.zeros_like(acc_ref)

    pts = points_ref[0].astype(jnp.float32)          # (D, TN)
    w = w_ref[...].astype(jnp.float32)               # (S, D)
    bias = bias_ref[...].astype(jnp.float32)         # (S, 1)
    g = gumbel_ref[0].astype(jnp.float32)            # (S, TN)

    # Conv1d(kernel_size=1) == matmul over the feature axis (MXU).
    logits = jnp.dot(w, pts, preferred_element_type=jnp.float32) + bias   # (S, TN)
    pert = (logits + g) * inv_tau                                         # (S, TN)

    if hard:
        # Hard Gumbel-softmax: per sample s, select the single point column at the
        # global argmax over N (straight-through forward value is the one-hot).
        S, TN = pert.shape
        tmax = jnp.max(pert, axis=1, keepdims=True)                        # (S, 1)
        lane = lax.broadcasted_iota(jnp.int32, (S, TN), 1)                 # (S, TN)
        first = jnp.min(jnp.where(pert == tmax, lane, TN),
                        axis=1, keepdims=True)                             # (S, 1)
        sel = (lane == first).astype(jnp.float32)                          # one-hot (S, TN)
        cand = jnp.dot(pts, sel.T, preferred_element_type=jnp.float32)     # (D, S)
        better = tmax > m_ref[...]                                         # (S, 1)
        m_ref[...] = jnp.where(better, tmax, m_ref[...])
        acc_ref[...] = jnp.where(jnp.transpose(better), cand, acc_ref[...])

        @pl.when(n_id == n_last)
        def _finalize_hard():
            out_ref[0] = acc_ref[...].astype(out_ref.dtype)
    else:
        # Soft Gumbel-softmax: online (flash-style) softmax over the point axis.
        m_prev = m_ref[...]                                                # (S, 1)
        m_new = jnp.maximum(m_prev, jnp.max(pert, axis=1, keepdims=True))  # (S, 1)
        alpha = jnp.exp(m_prev - m_new)                                    # (S, 1)
        p = jnp.exp(pert - m_new)                                          # (S, TN)
        l_ref[...] = alpha * l_ref[...] + jnp.sum(p, axis=1, keepdims=True)
        acc_ref[...] = acc_ref[...] * jnp.transpose(alpha) + \
            jnp.dot(pts, p.T, preferred_element_type=jnp.float32)          # (D, S)
        m_ref[...] = m_new

        @pl.when(n_id == n_last)
        def _finalize_soft():
            inv_l = pl.reciprocal(l_ref[...], approx=False)                # (S, 1)
            out_ref[0] = (acc_ref[...] * jnp.transpose(inv_l)).astype(out_ref.dtype)


def gumbel_subset_sampling(points, conv_w, conv_b, gumbel, *,
                           tau=1.0, hard=False, block_n=None):
    """Forward of GumbelSubsetSampling.

    points: (B, D, N)  (native dtype, e.g. bf16 or f32)
    conv_w: (S, D)     Conv1d(kernel_size=1) weight
    conv_b: (S,)       Conv1d bias
    gumbel: (B, S, N)  pre-sampled Gumbel(0,1) noise (f32)
    returns (B, D, S)
    """
    B, D, N = points.shape
    S = conv_w.shape[0]
    assert conv_w.shape == (S, D)
    assert conv_b.shape == (S,)
    assert gumbel.shape == (B, S, N)

    # Lane-dense tiling of the point axis. Prefer big tiles (amortize the ~0.35us
    # per-grid-step overhead) but stay modest so double-buffered tiles also fit
    # v7x's smaller VMEM.
    if block_n is None:
        block_n = N
        for cand in (1024, 512, 256, 128):
            if N % cand == 0:
                block_n = cand
                break
    assert N % block_n == 0, "block_n must divide N"
    n_blocks = N // block_n

    bias2d = conv_b.reshape(S, 1)

    kernel = functools.partial(_gss_kernel, inv_tau=float(1.0 / tau), hard=bool(hard))

    itemsize = points.dtype.itemsize
    cost = pl.CostEstimate(
        flops=4 * B * D * S * N,                   # two matmuls per point
        transcendentals=B * S * N,                 # exp over the perturbed logits
        bytes_accessed=(B * D * N * itemsize       # points
                        + B * S * N * 4            # gumbel noise (f32)
                        + S * D * itemsize + S * 4 # conv weight + bias
                        + B * D * S * itemsize),   # output
    )

    out = pl.pallas_call(
        kernel,
        out_shape=jax.ShapeDtypeStruct((B, D, S), points.dtype),
        grid_spec=pltpu.PrefetchScalarGridSpec(
            num_scalar_prefetch=0,
            grid=(B, n_blocks),
            in_specs=[
                pl.BlockSpec((1, D, block_n), lambda b, n: (b, 0, n)),   # points tile
                pl.BlockSpec((S, D), lambda b, n: (0, 0)),               # conv weight
                pl.BlockSpec((S, 1), lambda b, n: (0, 0)),               # conv bias
                pl.BlockSpec((1, S, block_n), lambda b, n: (b, 0, n)),   # gumbel tile
            ],
            out_specs=pl.BlockSpec((1, D, S), lambda b, n: (b, 0, 0)),
            scratch_shapes=[
                pltpu.VMEM((S, 1), jnp.float32),   # running max  m
                pltpu.VMEM((S, 1), jnp.float32),   # running sum  l
                pltpu.VMEM((D, S), jnp.float32),   # accumulator  acc
            ],
        ),
        compiler_params=pltpu.CompilerParams(
            dimension_semantics=("parallel", "arbitrary"),
        ),
        cost_estimate=cost,
    )(points, conv_w, bias2d, gumbel)
    return out


def _reference_gss(points, conv_w, conv_b, gumbel, tau, hard):
    """Pure-JAX reference matching torch Conv1d(k=1) + gumbel_softmax(dim=2) + matmul."""
    x = points.astype(jnp.float32)
    logits = jnp.einsum('sd,bdn->bsn', conv_w.astype(jnp.float32), x)
    logits = logits + conv_b.astype(jnp.float32)[None, :, None]
    pert = (logits + gumbel.astype(jnp.float32)) / tau
    if hard:
        idx = jnp.argmax(pert, axis=2)                                  # (B, S)
        y = jax.nn.one_hot(idx, pert.shape[2], dtype=jnp.float32)       # (B, S, N)
    else:
        y = jax.nn.softmax(pert, axis=2)                                # (B, S, N)
    out = jnp.einsum('bdn,bsn->bds', x, y)                              # (B, D, S)
    return out.astype(points.dtype)


if __name__ == "__main__":
    key = jax.random.PRNGKey(0)
    k1, k2, k3, k4 = jax.random.split(key, 4)

    B, D, N, S = 2, 32, 256, 16        # batch, input_dim, num points, num_sample
    tau = 1.0

    points = jax.random.normal(k1, (B, D, N), dtype=jnp.float32)
    conv_w = jax.random.normal(k2, (S, D), dtype=jnp.float32) * (1.0 / math.sqrt(D))
    conv_b = jax.random.normal(k3, (S,), dtype=jnp.float32) * 0.1
    gumbel = jax.random.gumbel(k4, (B, S, N), dtype=jnp.float32)

    # block_n=128 -> 2 point tiles per batch, exercising the online accumulation path.
    out_soft = gumbel_subset_sampling(points, conv_w, conv_b, gumbel,
                                      tau=tau, hard=False, block_n=128)
    out_hard = gumbel_subset_sampling(points, conv_w, conv_b, gumbel,
                                      tau=tau, hard=True, block_n=128)
    jax.block_until_ready((out_soft, out_hard))

    ref_soft = _reference_gss(points, conv_w, conv_b, gumbel, tau, False)
    ref_hard = _reference_gss(points, conv_w, conv_b, gumbel, tau, True)

    assert out_soft.shape == (B, D, S) and out_hard.shape == (B, D, S)
    assert jnp.allclose(out_soft, ref_soft, atol=1e-4, rtol=1e-4), "soft mode mismatch"
    assert jnp.allclose(out_hard, ref_hard, atol=1e-4, rtol=1e-4), "hard mode mismatch"
    print("KERNEL_OK")
</pallas_src>

<mosaic_0001>
module attributes {stable_mosaic.version = 11 : i64} {
  func.func @_gss_kernel(%arg0: i32, %arg1: i32, %arg2: memref<1x32x128xf32, #tpu.memory_space<vmem>>, %arg3: memref<16x32xf32, #tpu.memory_space<vmem>>, %arg4: memref<16x1xf32, #tpu.memory_space<vmem>>, %arg5: memref<1x16x128xf32, #tpu.memory_space<vmem>>, %arg6: memref<1x32x16xf32, #tpu.memory_space<vmem>>, %arg7: memref<16x1xf32, #tpu.memory_space<vmem>>, %arg8: memref<16x1xf32, #tpu.memory_space<vmem>>, %arg9: memref<32x16xf32, #tpu.memory_space<vmem>>) attributes {dimension_semantics = [#tpu.dimension_semantics<parallel>, #tpu.dimension_semantics<arbitrary>], iteration_bounds = array<i64: 2, 2>, scalar_prefetch = 0 : i64, scratch_operands = 3 : i64, tpu.core_type = #tpu.core_type<tc>, window_params = [{transform_indices = @transform_0, window_bounds = array<i64: 1, 32, 128>}, {pipeline_mode = #tpu.pipeline_mode<synchronous>, transform_indices = @transform_1, window_bounds = array<i64: 16, 32>}, {pipeline_mode = #tpu.pipeline_mode<synchronous>, transform_indices = @transform_2, window_bounds = array<i64: 16, 1>}, {transform_indices = @transform_3, window_bounds = array<i64: 1, 16, 128>}, {transform_indices = @transform_4, window_bounds = array<i64: 1, 32, 16>}]} {
    %c0_i32 = arith.constant 0 : i32
    %0 = arith.cmpi eq, %arg1, %c0_i32 : i32
    %1 = arith.extui %0 : i1 to i32
    %c0_i32_0 = arith.constant 0 : i32
    %2 = arith.cmpi ne, %1, %c0_i32_0 : i32
    scf.if %2 {
      %cst_27 = arith.constant 0xFF800000 : f32
      %42 = vector.broadcast %cst_27 : f32 to vector<16x1xf32>
      %c0_28 = arith.constant 0 : index
      %c0_29 = arith.constant 0 : index
      %43 = vector.load %arg7[%c0_28, %c0_29] : memref<16x1xf32, #tpu.memory_space<vmem>>, vector<16x1xf32>
      tpu.vector_store %arg7[%c0_28, %c0_29], %42 {strides = array<i32>} : memref<16x1xf32, #tpu.memory_space<vmem>>, vector<16x1xf32>,
      %cst_30 = arith.constant 0.000000e+00 : f32
      %44 = vector.broadcast %cst_30 : f32 to vector<16x1xf32>
      %c0_31 = arith.constant 0 : index
      %c0_32 = arith.constant 0 : index
      %45 = vector.load %arg8[%c0_31, %c0_32] : memref<16x1xf32, #tpu.memory_space<vmem>>, vector<16x1xf32>
      tpu.vector_store %arg8[%c0_31, %c0_32], %44 {strides = array<i32>} : memref<16x1xf32, #tpu.memory_space<vmem>>, vector<16x1xf32>,
      %cst_33 = arith.constant 0.000000e+00 : f32
      %46 = vector.broadcast %cst_33 : f32 to vector<32x16xf32>
      %c0_34 = arith.constant 0 : index
      %c0_35 = arith.constant 0 : index
      %47 = vector.load %arg9[%c0_34, %c0_35] : memref<32x16xf32, #tpu.memory_space<vmem>>, vector<32x16xf32>
      tpu.vector_store %arg9[%c0_34, %c0_35], %46 {strides = array<i32>} : memref<32x16xf32, #tpu.memory_space<vmem>>, vector<32x16xf32>,
    } else {
    }
    %c0 = arith.constant 0 : index
    %c0_1 = arith.constant 0 : index
    %c0_2 = arith.constant 0 : index
    %3 = vector.load %arg2[%c0, %c0_1, %c0_2] : memref<1x32x128xf32, #tpu.memory_space<vmem>>, vector<1x32x128xf32>
    %4 = vector.shape_cast %3 : vector<1x32x128xf32> to vector<32x128xf32>
    %c0_3 = arith.constant 0 : index
    %c0_4 = arith.constant 0 : index
    %5 = vector.load %arg3[%c0_3, %c0_4] : memref<16x32xf32, #tpu.memory_space<vmem>>, vector<16x32xf32>
    %c0_5 = arith.constant 0 : index
    %c0_6 = arith.constant 0 : index
    %6 = vector.load %arg4[%c0_5, %c0_6] : memref<16x1xf32, #tpu.memory_space<vmem>>, vector<16x1xf32>
    %c0_7 = arith.constant 0 : index
    %c0_8 = arith.constant 0 : index
    %c0_9 = arith.constant 0 : index
    %7 = vector.load %arg5[%c0_7, %c0_8, %c0_9] : memref<1x16x128xf32, #tpu.memory_space<vmem>>, vector<1x16x128xf32>
    %8 = vector.shape_cast %7 : vector<1x16x128xf32> to vector<16x128xf32>
    %cst = arith.constant dense<0.000000e+00> : vector<16x128xf32>
    %9 = tpu.matmul %5, %4, %cst {dimension_numbers = #tpu.dot_dimension_numbers<[1], [0], [0], [1], [0, 0, 1, 1], [], []>} : vector<16x32xf32>, vector<32x128xf32>, vector<16x128xf32> -> vector<16x128xf32>
    %10 = vector.broadcast %6 : vector<16x1xf32> to vector<16x128xf32>
    %11 = arith.addf %9, %10 : vector<16x128xf32>
    %12 = arith.addf %11, %8 : vector<16x128xf32>
    %cst_10 = arith.constant 1.000000e+00 : f32
    %13 = vector.broadcast %cst_10 : f32 to vector<16x128xf32>
    %14 = arith.mulf %12, %13 : vector<16x128xf32>
    %c0_11 = arith.constant 0 : index
    %c0_12 = arith.constant 0 : index
    %15 = vector.load %arg7[%c0_11, %c0_12] : memref<16x1xf32, #tpu.memory_space<vmem>>, vector<16x1xf32>
    %cst_13 = arith.constant dense<0xFF800000> : vector<16xf32>
    %16 = vector.multi_reduction <maximumf>, %14, %cst_13 [1] : vector<16x128xf32> to vector<16xf32>
    %17 = vector.shape_cast %16 : vector<16xf32> to vector<16x1xf32>
    %18 = arith.maximumf %15, %17 : vector<16x1xf32>
    %19 = arith.subf %15, %18 : vector<16x1xf32>
    %20 = math.exp %19 : vector<16x1xf32>
    %21 = vector.broadcast %18 : vector<16x1xf32> to vector<16x128xf32>
    %22 = arith.subf %14, %21 : vector<16x128xf32>
    %23 = math.exp %22 : vector<16x128xf32>
    %c0_14 = arith.constant 0 : index
    %c0_15 = arith.constant 0 : index
    %24 = vector.load %arg8[%c0_14, %c0_15] : memref<16x1xf32, #tpu.memory_space<vmem>>, vector<16x1xf32>
    %25 = arith.mulf %20, %24 : vector<16x1xf32>
    %cst_16 = arith.constant dense<0.000000e+00> : vector<16xf32>
    %26 = vector.multi_reduction <add>, %23, %cst_16 [1] : vector<16x128xf32> to vector<16xf32>
    %27 = vector.shape_cast %26 : vector<16xf32> to vector<16x1xf32>
    %28 = arith.addf %25, %27 : vector<16x1xf32>
    %c0_17 = arith.constant 0 : index
    %c0_18 = arith.constant 0 : index
    %29 = vector.load %arg8[%c0_17, %c0_18] : memref<16x1xf32, #tpu.memory_space<vmem>>, vector<16x1xf32>
    tpu.vector_store %arg8[%c0_17, %c0_18], %28 {strides = array<i32>} : memref<16x1xf32, #tpu.memory_space<vmem>>, vector<16x1xf32>,
    %c0_19 = arith.constant 0 : index
    %c0_20 = arith.constant 0 : index
    %30 = vector.load %arg9[%c0_19, %c0_20] : memref<32x16xf32, #tpu.memory_space<vmem>>, vector<32x16xf32>
    %31 = tpu.transpose %20, [1, 0] : vector<16x1xf32> -> vector<1x16xf32>
    %32 = vector.broadcast %31 : vector<1x16xf32> to vector<32x16xf32>
    %33 = arith.mulf %30, %32 : vector<32x16xf32>
    %34 = tpu.transpose %23, [1, 0] : vector<16x128xf32> -> vector<128x16xf32>
    %cst_21 = arith.constant dense<0.000000e+00> : vector<32x16xf32>
    %35 = tpu.matmul %4, %34, %cst_21 {dimension_numbers = #tpu.dot_dimension_numbers<[1], [0], [0], [1], [0, 0, 1, 1], [], []>} : vector<32x128xf32>, vector<128x16xf32>, vector<32x16xf32> -> vector<32x16xf32>
    %36 = arith.addf %33, %35 : vector<32x16xf32>
    %c0_22 = arith.constant 0 : index
    %c0_23 = arith.constant 0 : index
    %37 = vector.load %arg9[%c0_22, %c0_23] : memref<32x16xf32, #tpu.memory_space<vmem>>, vector<32x16xf32>
    tpu.vector_store %arg9[%c0_22, %c0_23], %36 {strides = array<i32>} : memref<32x16xf32, #tpu.memory_space<vmem>>, vector<32x16xf32>,
    %c0_24 = arith.constant 0 : index
    %c0_25 = arith.constant 0 : index
    %38 = vector.load %arg7[%c0_24, %c0_25] : memref<16x1xf32, #tpu.memory_space<vmem>>, vector<16x1xf32>
    tpu.vector_store %arg7[%c0_24, %c0_25], %18 {strides = array<i32>} : memref<16x1xf32, #tpu.memory_space<vmem>>, vector<16x1xf32>,
    %c1_i32 = arith.constant 1 : i32
    %39 = arith.cmpi eq, %arg1, %c1_i32 : i32
    %40 = arith.extui %39 : i1 to i32
    %c0_i32_26 = arith.constant 0 : i32
    %41 = arith.cmpi ne, %40, %c0_i32_26 : i32
    scf.if %41 {
      %c0_27 = arith.constant 0 : index
      %c0_28 = arith.constant 0 : index
      %42 = vector.load %arg8[%c0_27, %c0_28] : memref<16x1xf32, #tpu.memory_space<vmem>>, vector<16x1xf32>
      %43 = tpu.reciprocal %42 : vector<16x1xf32> -> vector<16x1xf32>
      %c0_29 = arith.constant 0 : index
      %c0_30 = arith.constant 0 : index
      %44 = vector.load %arg9[%c0_29, %c0_30] : memref<32x16xf32, #tpu.memory_space<vmem>>, vector<32x16xf32>
      %45 = tpu.transpose %43, [1, 0] : vector<16x1xf32> -> vector<1x16xf32>
      %46 = vector.broadcast %45 : vector<1x16xf32> to vector<32x16xf32>
      %47 = arith.mulf %44, %46 : vector<32x16xf32>
      %c0_31 = arith.constant 0 : index
      %c0_32 = arith.constant 0 : index
      %c0_33 = arith.constant 0 : index
      %48 = vector.load %arg6[%c0_31, %c0_32, %c0_33] : memref<1x32x16xf32, #tpu.memory_space<vmem>>, vector<1x32x16xf32>
      %49 = vector.shape_cast %48 : vector<1x32x16xf32> to vector<32x16xf32>
      %50 = vector.shape_cast %47 : vector<32x16xf32> to vector<1x32x16xf32>
      tpu.vector_store %arg6[%c0_31, %c0_32, %c0_33], %50 {strides = array<i32>} : memref<1x32x16xf32, #tpu.memory_space<vmem>>, vector<1x32x16xf32>,
    } else {
    }
    return
  }
  func.func @transform_0(%arg0: i32, %arg1: i32) -> (i32, i32, i32) {
    %c0_i32 = arith.constant 0 : i32
    %c0_i32_0 = arith.constant 0 : i32
    return %arg0, %c0_i32, %arg1 : i32, i32, i32
  }
  func.func @transform_1(%arg0: i32, %arg1: i32) -> (i32, i32) {
    %c0_i32 = arith.constant 0 : i32
    %c0_i32_0 = arith.constant 0 : i32
    %c0_i32_1 = arith.constant 0 : i32
    return %c0_i32, %c0_i32_0 : i32, i32
  }
  func.func @transform_2(%arg0: i32, %arg1: i32) -> (i32, i32) {
    %c0_i32 = arith.constant 0 : i32
    %c0_i32_0 = arith.constant 0 : i32
    %c0_i32_1 = arith.constant 0 : i32
    return %c0_i32, %c0_i32_0 : i32, i32
  }
  func.func @transform_3(%arg0: i32, %arg1: i32) -> (i32, i32, i32) {
    %c0_i32 = arith.constant 0 : i32
    %c0_i32_0 = arith.constant 0 : i32
    return %arg0, %c0_i32, %arg1 : i32, i32, i32
  }
  func.func @transform_4(%arg0: i32, %arg1: i32) -> (i32, i32, i32) {
    %c0_i32 = arith.constant 0 : i32
    %c0_i32_0 = arith.constant 0 : i32
    %c0_i32_1 = arith.constant 0 : i32
    return %arg0, %c0_i32, %c0_i32_0 : i32, i32, i32
  }
}

</mosaic_0001>

<llo_original>
// kernel: tpu_custom_call.1
$region0: #{tpu_custom_call.1}
  #allocation0 [shape = 'u32[]', space=smem, size = 0x4, offset = 0x4, fixed_abs, tag = 'smem constant byte address 0x4 - core index']
  #allocation1 [shape = 'u32[144,128]{1,0:T(1,128)}', space=vmem, size = 0x12000, scoped, tag = 'internal scratch']
  #allocation2 [shape = 'f32[16,1]{1,0:T(8,128)}', space=vmem, size = 0x2000, scoped, tag = 'scratch operand']
  #allocation3 [shape = 'f32[16,1]{1,0:T(8,128)}', space=vmem, size = 0x2000, scoped, tag = 'scratch operand']
  #allocation4 [shape = 'f32[32,16]{1,0:T(8,128)}', space=vmem, size = 0x4000, scoped, tag = 'scratch operand']
  %s0 = inlined_call_operand.hbm [shape: f32[2,32,256], index: 0, kind: input, shape index: {}]
  %s1 = inlined_call_operand.vmem [shape: f32[16,32], index: 1, kind: input, shape index: {}]
  %s2 = inlined_call_operand.vmem [shape: f32[16,1], index: 2, kind: input, shape index: {}]
  %s3 = inlined_call_operand.hbm [shape: f32[2,16,256], index: 3, kind: input, shape index: {}]
  %s4 = inlined_call_operand.vmem [shape: f32[2,32,16], index: 4, kind: output, shape index: {}]
  %s5 = sld [smem:[#allocation0]]
  $region65: #{tpu_custom_call.1} parent=0
    _
  %s7 = ssub.s32 1, %s5
  %s8 = scalar_select 0, %s7, %s5
  $region1: #{tpu_custom_call.1} parent=0
    #allocation5 [shape = 'u8[32768]{0}', space=vmem, size = 0x8000, scoped, tag = 'input window, operand 0']
    #allocation6 [shape = 's32[2]{0}', space=sflag, size = 0x8, scoped, tag = 'scoped memory for tpu_custom_call.1']
    #allocation7 [shape = 'u8[16384]{0}', space=vmem, size = 0x4000, scoped, tag = 'input window, operand 3']
    #allocation8 [shape = 's32[2]{0}', space=sflag, size = 0x8, scoped, tag = 'scoped memory for tpu_custom_call.1']
    %9 = vsyncpa [#allocation6], 0
    %s10 = scalar_lea.sflag [#allocation6], 1
    %11 = vsyncpa %s10, 0
    %12 = vsyncpa [#allocation8], 0
    %s13 = scalar_lea.sflag [#allocation8], 1
    %14 = vsyncpa %s13, 0
    loop: start=0, step=1, limit=6
    $region2: #{tpu_custom_call.1} parent=1 // loop_pre_header
      _
    $region3: #{tpu_custom_call.1} parent=1 // loop_header
      %s16 = sphi 0, %s20
      %p17 = scmp.ge.s32.totalorder %s16, 6
      %s23 = sphi 0, %s35
      %s24 = sphi 0, %s31
      %s25 = sphi 0, %s23
      %s26 = sphi 0, %s24
      %s27 = sphi 0, %s25
      %s28 = sphi 0, %s26
      %s40 = sphi 0, %s42
      %s43 = sphi 0, %s40
      %s44 = sphi 0, %s43
      %s60 = sphi 0, %s44
      %s64 = sphi 0, %s64
      %s66 = sphi 0, %s64
      %s67 = sphi 0, %s66
      %s81 = sphi 0, %s67
      %s85 = sphi 0, %s85
      %s87 = sphi 0, %s85
      %s88 = sphi 0, %s87
      %s102 = sphi 0, %s88
      %s110 = sphi 0, %s112
      %s113 = sphi 0, %s110
      %s114 = sphi 0, %s113
      %s130 = sphi 0, %s114
      %s136 = sphi 0, %s138
      %s139 = sphi 0, %s136
      %s140 = sphi 0, %s139
      %s156 = sphi 0, %s140
    $region4: #{tpu_custom_call.1} parent=1 // loop_header_branch
      %19 = sbr.rel (%p17) target = $region8
    $region5: #{tpu_custom_call.1} parent=1 // loop_body
      %s21 = ssub.s32 %s16, 1
      %s22 = ssub.s32 %s16, 2
      %s29 = sadd.s32 1, %s24
      %p30 = scmp.ge.s32.totalorder %s29, 2
      %s31 = scalar_select %p30, 0, %s29
      %s32 = sadd.s32 1, %s23
      %s33 = scalar_select %p30, %s32, %s23
      %p34 = scmp.ge.s32.totalorder %s33, 2
      %s35 = scalar_select %p34, 0, %s33
      %s36 = ssub.s32 %s23, %s35
      %s37 = ssub.s32 %s24, %s31
      %s38 = sor.u32 %s36, %s37
      %p39 = scmp.eq.s32.totalorder %s38, 0
      %s41 = sadd.s32 %s40, 1
      %s42 = scalar_select %p39, %s40, %s41
      %p45 = pneg %p39
      %p46 = scmp.eq.s32.totalorder %s16, 3
      %p47 = por %p45, %p46
      %p48 = scmp.ne.s32.totalorder %s40, %s43
      %p49 = scmp.eq.s32.totalorder %s16, 0
      %p50 = por %p48, %p49
      %p51 = scmp.ne.s32.totalorder %s40, %s43
      %p52 = scmp.eq.s32.totalorder %s21, 3
      %p53 = por %p51, %p52
      %p54 = scmp.ne.s32.totalorder %s43, %s44
      %p55 = scmp.eq.s32.totalorder %s21, 0
      %p56 = por %p54, %p55
      %p57 = scmp.ne.s32.totalorder %s43, %s44
      %p58 = scmp.eq.s32.totalorder %s22, 3
      %p59 = por %p57, %p58
      %p61 = scmp.ne.s32.totalorder %s44, %s60
      %p62 = scmp.eq.s32.totalorder %s22, 0
      %p63 = por %p61, %p62
      %s65 = sadd.s32 %s64, 1
      %p68 = scmp.eq.s32.totalorder %s16, 3
      %p69 = scmp.ne.s32.totalorder %s64, %s66
      %p70 = scmp.eq.s32.totalorder %s16, 0
      %p71 = por %p69, %p70
      %p72 = scmp.ne.s32.totalorder %s64, %s66
      %p73 = scmp.eq.s32.totalorder %s21, 3
      %p74 = por %p72, %p73
      %p75 = scmp.ne.s32.totalorder %s66, %s67
      %p76 = scmp.eq.s32.totalorder %s21, 0
      %p77 = por %p75, %p76
      %p78 = scmp.ne.s32.totalorder %s66, %s67
      %p79 = scmp.eq.s32.totalorder %s22, 3
      %p80 = por %p78, %p79
      %p82 = scmp.ne.s32.totalorder %s67, %s81
      %p83 = scmp.eq.s32.totalorder %s22, 0
      %p84 = por %p82, %p83
      %s86 = sadd.s32 %s85, 1
      %p89 = scmp.eq.s32.totalorder %s16, 3
      %p90 = scmp.ne.s32.totalorder %s85, %s87
      %p91 = scmp.eq.s32.totalorder %s16, 0
      %p92 = por %p90, %p91
      %p93 = scmp.ne.s32.totalorder %s85, %s87
      %p94 = scmp.eq.s32.totalorder %s21, 3
      %p95 = por %p93, %p94
      %p96 = scmp.ne.s32.totalorder %s87, %s88
      %p97 = scmp.eq.s32.totalorder %s21, 0
      %p98 = por %p96, %p97
      %p99 = scmp.ne.s32.totalorder %s87, %s88
      %p100 = scmp.eq.s32.totalorder %s22, 3
      %p101 = por %p99, %p100
      %p103 = scmp.ne.s32.totalorder %s88, %s102
      %p104 = scmp.eq.s32.totalorder %s22, 0
      %p105 = por %p103, %p104
      %s106 = ssub.s32 %s23, %s35
      %s107 = ssub.s32 %s24, %s31
      %s108 = sor.u32 %s106, %s107
      %p109 = scmp.eq.s32.totalorder %s108, 0
      %s111 = sadd.s32 %s110, 1
      %s112 = scalar_select %p109, %s110, %s111
      %p115 = pneg %p109
      %p116 = scmp.eq.s32.totalorder %s16, 3
      %p117 = por %p115, %p116
      %p118 = scmp.ne.s32.totalorder %s110, %s113
      %p119 = scmp.eq.s32.totalorder %s16, 0
      %p120 = por %p118, %p119
      %p121 = scmp.ne.s32.totalorder %s110, %s113
      %p122 = scmp.eq.s32.totalorder %s21, 3
      %p123 = por %p121, %p122
      %p124 = scmp.ne.s32.totalorder %s113, %s114
      %p125 = scmp.eq.s32.totalorder %s21, 0
      %p126 = por %p124, %p125
      %p127 = scmp.ne.s32.totalorder %s113, %s114
      %p128 = scmp.eq.s32.totalorder %s22, 3
      %p129 = por %p127, %p128
      %p131 = scmp.ne.s32.totalorder %s114, %s130
      %p132 = scmp.eq.s32.totalorder %s22, 0
      %p133 = por %p131, %p132
      %s134 = ssub.s32 %s23, %s35
      %p135 = scmp.eq.s32.totalorder %s134, 0
      %s137 = sadd.s32 %s136, 1
      %s138 = scalar_select %p135, %s136, %s137
      %p141 = pneg %p135
      %p142 = scmp.eq.s32.totalorder %s16, 3
      %p143 = por %p141, %p142
      %p144 = scmp.ne.s32.totalorder %s136, %s139
      %p145 = scmp.eq.s32.totalorder %s16, 0
      %p146 = por %p144, %p145
      %p147 = scmp.ne.s32.totalorder %s136, %s139
      %p148 = scmp.eq.s32.totalorder %s21, 3
      %p149 = por %p147, %p148
      %p150 = scmp.ne.s32.totalorder %s139, %s140
      %p151 = scmp.eq.s32.totalorder %s21, 0
      %p152 = por %p150, %p151
      %p153 = scmp.ne.s32.totalorder %s139, %s140
      %p154 = scmp.eq.s32.totalorder %s22, 3
      %p155 = por %p153, %p154
      %p157 = scmp.ne.s32.totalorder %s140, %s156
      %p158 = scmp.eq.s32.totalorder %s22, 0
      %p159 = por %p157, %p158
      %p160 = scmp.le.s32.totalorder 1, %s16
      %p161 = scmp.lt.s32.totalorder %s16, 5
      %p162 = pnand %p160, %p161
      %p163 = pneg %p162
      // Predicated region
      $region9: #{tpu_custom_call.1} parent=5 // pred_check
        _
      $region10: #{tpu_custom_call.1} parent=5 // pred_check_branch
        %165 = sbr.rel (%p162) target = $region12
      $region11: #{tpu_custom_call.1} parent=5 // pred_region
        %s166 = ssub.s32 %s16, 1
        // Predicated region
        $region13: #{tpu_custom_call.1} parent=11 // pred_check
          %p167 = pneg %p77
        $region14: #{tpu_custom_call.1} parent=11 // pred_check_branch
          %169 = sbr.rel (%p167) target = $region16
        $region15: #{tpu_custom_call.1} parent=11 // pred_region
          _
        $region16: #{tpu_custom_call.1} parent=11 // pred_fallthru
          _
        // Predicated region
        $region17: #{tpu_custom_call.1} parent=11 // pred_check
          %p170 = pneg %p98
        $region18: #{tpu_custom_call.1} parent=11 // pred_check_branch
          %172 = sbr.rel (%p170) target = $region20
        $region19: #{tpu_custom_call.1} parent=11 // pred_region
          _
        $region20: #{tpu_custom_call.1} parent=11 // pred_fallthru
          _
      $region12: #{tpu_custom_call.1} parent=5 // pred_fallthru
        _
      %p173 = scmp.lt.s32.totalorder %s16, 4
      // Predicated region
      $region21: #{tpu_custom_call.1} parent=5 // pred_check
        %p174 = pneg %p173
      $region22: #{tpu_custom_call.1} parent=5 // pred_check_branch
        %176 = sbr.rel (%p174) target = $region24
      $region23: #{tpu_custom_call.1} parent=5 // pred_region
        // Predicated region
        $region25: #{tpu_custom_call.1} parent=23 // pred_check
          %p177 = pneg %p50
        $region26: #{tpu_custom_call.1} parent=23 // pred_check_branch
          %179 = sbr.rel (%p177) target = $region28
        $region27: #{tpu_custom_call.1} parent=23 // pred_region
          %s180 = sand.u32 %s40, 1
          %s181 = scalar_lea.sflag [#allocation6], %s180
          %s182 = sand.u32 %s40, 1
          %s183 = smul.addr %s182, 32
          %s184 = scalar_lea.vmem [#allocation5], %s183
          %s186 = ssub.s32 512, 512
          %187 = vsyncadd %s181, %s186
          %s188 = smul.addr %s23, 8
          %s189 = sadd.s32 %s24, %s188
          %s190 = smul.addr %s189, 128
          %s191 = scalar_lea.hbm %s0, %s190
          %s192 = sshll.u32 %s184, 4
          %s193 = int_to_ptr.vmem [resolvable:$true] %s192
          %198 = dma.hbm_to_vmem [thread:$0]  %s191, 512, %s193, %s181, 256, 128, 8
        $region28: #{tpu_custom_call.1} parent=23 // pred_fallthru
          _
        // Predicated region
        $region29: #{tpu_custom_call.1} parent=23 // pred_check
          %p199 = pneg %p120
        $region30: #{tpu_custom_call.1} parent=23 // pred_check_branch
          %201 = sbr.rel (%p199) target = $region32
        $region31: #{tpu_custom_call.1} parent=23 // pred_region
          %s202 = sand.u32 %s110, 1
          %s203 = scalar_lea.sflag [#allocation8], %s202
          %s204 = sand.u32 %s110, 1
          %s205 = smul.addr %s204, 16
          %s206 = scalar_lea.vmem [#allocation7], %s205
          %s208 = ssub.s32 256, 256
          %209 = vsyncadd %s203, %s208
          %s210 = smul.addr %s23, 4
          %s211 = sadd.s32 %s24, %s210
          %s212 = smul.addr %s211, 128
          %s213 = scalar_lea.hbm %s3, %s212
          %s214 = sshll.u32 %s206, 4
          %s215 = int_to_ptr.vmem [resolvable:$true] %s214
          %220 = dma.hbm_to_vmem [thread:$0]  %s213, 256, %s215, %s203, 256, 128, 8
        $region32: #{tpu_custom_call.1} parent=23 // pred_fallthru
          _
      $region24: #{tpu_custom_call.1} parent=5 // pred_fallthru
        _
      %p221 = scmp.le.s32.totalorder 1, %s16
      %p222 = scmp.lt.s32.totalorder %s16, 5
      %p223 = pnand %p221, %p222
      %p224 = pneg %p223
      // Predicated region
      $region33: #{tpu_custom_call.1} parent=5 // pred_check
        _
      $region34: #{tpu_custom_call.1} parent=5 // pred_check_branch
        %226 = sbr.rel (%p223) target = $region36
      $region35: #{tpu_custom_call.1} parent=5 // pred_region
        %s227 = ssub.s32 %s16, 1
        %s228 = sand.u32 %s43, 1
        %s229 = scalar_lea.sflag [#allocation6], %s228
        %s230 = sand.u32 %s43, 1
        %s231 = smul.addr %s230, 32
        %s232 = scalar_lea.vmem [#allocation5], %s231
        // Predicated region
        $region37: #{tpu_custom_call.1} parent=35 // pred_check
          %p233 = pneg %p56
        $region38: #{tpu_custom_call.1} parent=35 // pred_check_branch
          %235 = sbr.rel (%p233) target = $region40
        $region39: #{tpu_custom_call.1} parent=35 // pred_region
          %236 = dma.done %s229, 512
        $region40: #{tpu_custom_call.1} parent=35 // pred_fallthru
          _
        %s237 = sand.u32 %s113, 1
        %s238 = scalar_lea.sflag [#allocation8], %s237
        %s239 = sand.u32 %s113, 1
        %s240 = smul.addr %s239, 16
        %s241 = scalar_lea.vmem [#allocation7], %s240
        // Predicated region
        $region41: #{tpu_custom_call.1} parent=35 // pred_check
          %p242 = pneg %p126
        $region42: #{tpu_custom_call.1} parent=35 // pred_check_branch
          %244 = sbr.rel (%p242) target = $region44
        $region43: #{tpu_custom_call.1} parent=35 // pred_region
          %245 = dma.done %s238, 256
        $region44: #{tpu_custom_call.1} parent=35 // pred_fallthru
          _
        %s246 = sand.u32 %s43, 1
        %s247 = scalar_lea.sflag [#allocation6], %s246
        %s248 = sand.u32 %s43, 1
        %s249 = smul.addr %s248, 32
        %s250 = scalar_lea.vmem [#allocation5], %s249
        %p251 = pneg %p56
        %p252 = pneg %p53
        %p253 = pneg %p77
        %p254 = pneg %p74
        %p255 = pneg %p98
        %p256 = pneg %p95
        %s257 = sand.u32 %s113, 1
        %s258 = scalar_lea.sflag [#allocation8], %s257
        %s259 = sand.u32 %s113, 1
        %s260 = smul.addr %s259, 16
        %s261 = scalar_lea.vmem [#allocation7], %s260
        %p262 = pneg %p126
        %p263 = pneg %p123
        %p264 = pneg %p152
        %p265 = pneg %p149
        %p266 = scmp.lt.s32.totalorder %s25, 1
        %s267 = scalar_select %p266, %s25, 1
        %s268 = smul.addr %s267, 4
        %s269 = smul.addr %s268, 8
        %s270 = scalar_lea.vmem %s4, %s269
        %p271 = scmp.lt.s32.totalorder %s25, 1
        %s272 = scalar_select %p271, %s25, 1
        %s273 = smul.addr %s272, 4
        %s274 = smul.addr %s273, 8
        %s275 = scalar_lea.vmem %s4, %s274
        %p276 = scmp.eq.s32.totalorder %s26, 0
        // Predicated region
        $region45: #{tpu_custom_call.1} parent=35 // pred_check
          %p277 = pneg %p276
        $region46: #{tpu_custom_call.1} parent=35 // pred_check_branch
          %279 = sbr.rel (%p277) target = $region48
        $region47: #{tpu_custom_call.1} parent=35 // pred_region
          %vm280 = vcmask 7168
          %281 = vst.msk [vmem:[#allocation2] sm:$0xff] %vm280, -inf
          %282 = vst.msk [vmem:[#allocation2 + $0x8] sm:$0xff] %vm280, -inf
          %283 = vst.msk [vmem:[#allocation3] sm:$0xff] %vm280, 0.0
          %284 = vst.msk [vmem:[#allocation3 + $0x8] sm:$0xff] %vm280, 0.0
          %vm285 = vcmask 130048
          %286 = vst.msk [vmem:[#allocation4] sm:$0xff] %vm285, 0.0
          %287 = vst.msk [vmem:[#allocation4 + $0x8] sm:$0xff] %vm285, 0.0
          %288 = vst.msk [vmem:[#allocation4 + $0x10] sm:$0xff] %vm285, 0.0
          %289 = vst.msk [vmem:[#allocation4 + $0x18] sm:$0xff] %vm285, 0.0
        $region48: #{tpu_custom_call.1} parent=35 // pred_fallthru
          _
        %v290 = vld [vmem:[%s232] sm:$0xff]
        %v291 = vld [vmem:[%s232 + $0x8] sm:$0xff]
        %v292 = vld [vmem:[%s232 + $0x10] sm:$0xff]
        %v293 = vld [vmem:[%s232 + $0x18] sm:$0xff]
        %v294 = vld [vmem:[%s1] sm:$0xff]
        %v295 = vld [vmem:[%s1 + $0x8] sm:$0xff]
        %v296 = vld [vmem:[%s2] sm:$0xff]
        %v297 = vld [vmem:[%s2 + $0x8] sm:$0xff]
        %v298 = vld [vmem:[%s241] sm:$0xff]
        %v299 = vld [vmem:[%s241 + $0x8] sm:$0xff]
        %301 = vset.pattern.permute.xlu0 0
        %302 = vperm.xlu0 %301, %v296
        %v303 = vpop.permute.xlu0 %302
        %306 = vset.pattern.permute.xlu0 0
        %307 = vperm.xlu0 %306, %v297
        %v308 = vpop.permute.xlu0 %307
        %vm310 = vcmask 261120
        %v312 = vsel %vm310, %v294, 0
        %v315 = vsel %vm310, %v295, 0
        %317 = vmatprep.subr.mxu0 0.0
        %318 = vmatpush1.msra.mxu0 0.0
        %319 = vmatprep.subr.mxu0 0.0
        %320 = vmatpush1.msra.mxu0 0.0
        %321 = vmatprep.subr.mxu0 0.0
        %322 = vmatpush1.msra.mxu0 0.0
        %323 = vmatprep.subr.mxu0 0.0
        %324 = vmatpush1.msra.mxu0 0.0
        %325 = vmatprep.subr.mxu0 0.0
        %326 = vmatpush1.msra.mxu0 0.0
        %327 = vmatprep.subr.mxu0 0.0
        %328 = vmatpush1.msra.mxu0 0.0
        %329 = vmatprep.subr.mxu0 0.0
        %330 = vmatpush1.msra.mxu0 0.0
        %331 = vmatprep.subr.mxu0 0.0
        %332 = vmatpush1.msra.mxu0 0.0
        %333 = vmatprep.subr.mxu0 0.0
        %334 = vmatpush1.msra.mxu0 0.0
        %335 = vmatprep.subr.mxu0 0.0
        %336 = vmatpush1.msra.mxu0 0.0
        %337 = vmatprep.subr.mxu0 0.0
        %338 = vmatpush1.msra.mxu0 0.0
        %339 = vmatprep.subr.mxu0 0.0
        %340 = vmatpush1.msra.mxu0 0.0
        %341 = vmatprep.subr.mxu0 0.0
        %342 = vmatpush1.msra.mxu0 %v293
        %343 = vmatprep.subr.mxu0 0.0
        %344 = vmatpush1.msra.mxu0 %v292
        %345 = vmatprep.subr.mxu0 0.0
        %346 = vmatpush1.msra.mxu0 %v291
        %347 = vmatprep.subr.mxu0 0.0
        %348 = vmatpush1.msra.mxu0 %v290
        %349 = vmatprep.subr.mxu0 0.0
        %350 = vmatpush2.msra.mxu0 0.0
        %351 = vmatprep.subr.mxu0 0.0
        %352 = vmatpush2.msra.mxu0 0.0
        %353 = vmatprep.subr.mxu0 0.0
        %354 = vmatpush2.msra.mxu0 0.0
        %355 = vmatprep.subr.mxu0 0.0
        %356 = vmatpush2.msra.mxu0 0.0
        %357 = vmatprep.subr.mxu0 0.0
        %358 = vmatpush2.msra.mxu0 0.0
        %359 = vmatprep.subr.mxu0 0.0
        %360 = vmatpush2.msra.mxu0 0.0
        %361 = vmatprep.subr.mxu0 0.0
        %362 = vmatpush2.msra.mxu0 0.0
        %363 = vmatprep.subr.mxu0 0.0
        %364 = vmatpush2.msra.mxu0 0.0
        %365 = vmatprep.subr.mxu0 0.0
        %366 = vmatpush2.msra.mxu0 0.0
        %367 = vmatprep.subr.mxu0 0.0
        %368 = vmatpush2.msra.mxu0 0.0
        %369 = vmatprep.subr.mxu0 0.0
        %370 = vmatpush2.msra.mxu0 0.0
        %371 = vmatprep.subr.mxu0 0.0
        %372 = vmatpush2.msra.mxu0 0.0
        %373 = vmatprep.subr.mxu0 0.0
        %374 = vmatpush2.msra.mxu0 0.0
        %375 = vmatprep.subr.mxu0 0.0
        %376 = vmatpush2.msra.mxu0 0.0
        %377 = vmatprep.subr.mxu0 0.0
        %378 = vmatpush2.msra.mxu0 0.0
        %379 = vmatprep.subr.mxu0 0.0
        %380 = vmatpush2.msra.mxu0 0.0
        %381 = vmatprep.mubr.f32.mxu0 0.0
        %382 = vmatmul.mubr.f32.gmra.mxu0 %v312
        %v383 = vpop.f32.mrf.mxu0
        %v384 = vadd.f32 %v303, %v383
        %v385 = vpop.f32.mrf.mxu0
        %386 = vmatprep.mubr.f32.mxu0 0.0
        %387 = vmatmul.mubr.f32.gmra.mxu0 %v315
        %v388 = vpop.f32.mrf.mxu0
        %v389 = vadd.f32 %v308, %v388
        %v390 = vpop.f32.mrf.mxu0
        %391 = vdwg.mxu0
        %v392 = vadd.f32 %v384, %v298
        %v393 = vadd.f32 %v389, %v299
        %v394 = vld [vmem:[#allocation2] sm:$0xff]
        %v395 = vld [vmem:[#allocation2 + $0x8] sm:$0xff]
        %396 = vmax.xlane.f32.xlu0 %v392
        %v397 = vpop.xlane.xlu0 %396
        %398 = vmax.xlane.f32.xlu0 %v393
        %v399 = vpop.xlane.xlu0 %398
        %v400 = vmax.f32 %v394, %v397
        %v401 = vmax.f32 %v395, %v399
        %v402 = vsub.f32 %v394, %v400
        %v403 = vsub.f32 %v395, %v401
        %v404 = vmul.f32 %v402, 1.442695
        %v405 = vpow.pop %v404
        %v406 = vmul.f32 %v403, 1.442695
        %v407 = vpow.pop %v406
        %409 = vset.pattern.permute.xlu0 0
        %410 = vperm.xlu0 %409, %v400
        %v411 = vpop.permute.xlu0 %410
        %414 = vset.pattern.permute.xlu0 0
        %415 = vperm.xlu0 %414, %v401
        %v416 = vpop.permute.xlu0 %415
        %v418 = vsub.f32 %v392, %v411
        %v419 = vsub.f32 %v393, %v416
        %v420 = vmul.f32 %v418, 1.442695
        %v421 = vpow.pop %v420
        %v422 = vmul.f32 %v419, 1.442695
        %v423 = vpow.pop %v422
        %v424 = vld [vmem:[#allocation3] sm:$0xff]
        %v425 = vld [vmem:[#allocation3 + $0x8] sm:$0xff]
        %v426 = vmul.f32 %v405, %v424
        %v427 = vmul.f32 %v407, %v425
        %428 = vadd.xlane.f32.xlu0 %v421
        %v429 = vpop.xlane.xlu0 %428
        %430 = vadd.xlane.f32.xlu0 %v423
        %v431 = vpop.xlane.xlu0 %430
        %v432 = vadd.f32 %v426, %v429
        %v433 = vadd.f32 %v427, %v431
        %vm434 = vcmask 7168
        %435 = vst.msk [vmem:[#allocation3] sm:$0xff] %vm434, %v432
        %436 = vst.msk [vmem:[#allocation3 + $0x8] sm:$0xff] %vm434, %v433
        %v437 = vld [vmem:[#allocation4] sm:$0xff]
        %v438 = vld [vmem:[#allocation4 + $0x8] sm:$0xff]
        %v439 = vld [vmem:[#allocation4 + $0x10] sm:$0xff]
        %v440 = vld [vmem:[#allocation4 + $0x18] sm:$0xff]
        %441 = vxpose.xlu0.b32.start [1/16] %v405, 128
        %442 = vxpose.xlu0.b32.cont [2/16] %v407, 128
        %443 = vxpose.xlu0.b32.cont [3/16] 0.0, 128
        %444 = vxpose.xlu0.b32.cont [4/16] 0.0, 128
        %445 = vxpose.xlu0.b32.cont [5/16] 0.0, 128
        %446 = vxpose.xlu0.b32.cont [6/16] 0.0, 128
        %447 = vxpose.xlu0.b32.cont [7/16] 0.0, 128
        %448 = vxpose.xlu0.b32.cont [8/16] 0.0, 128
        %449 = vxpose.xlu0.b32.cont [9/16] 0.0, 128
        %450 = vxpose.xlu0.b32.cont [10/16] 0.0, 128
        %451 = vxpose.xlu0.b32.cont [11/16] 0.0, 128
        %452 = vxpose.xlu0.b32.cont [12/16] 0.0, 128
        %453 = vxpose.xlu0.b32.cont [13/16] 0.0, 128
        %454 = vxpose.xlu0.b32.cont [14/16] 0.0, 128
        %455 = vxpose.xlu0.b32.cont [15/16] 0.0, 128
        %456 = vxpose.xlu0.b32.end [16/16] 0.0, 128
        %v457 = vpop.trf.xlu0
        %v458 = vpop.trf.xlu0
        %v459 = vpop.trf.xlu0
        %v460 = vpop.trf.xlu0
        %v461 = vpop.trf.xlu0
        %v462 = vpop.trf.xlu0
        %v463 = vpop.trf.xlu0
        %v464 = vpop.trf.xlu0
        %v465 = vpop.trf.xlu0
        %v466 = vpop.trf.xlu0
        %v467 = vpop.trf.xlu0
        %v468 = vpop.trf.xlu0
        %v469 = vpop.trf.xlu0
        %v470 = vpop.trf.xlu0
        %v471 = vpop.trf.xlu0
        %v472 = vpop.trf.xlu0
        %v473 = vlaneseq
        %v474 = vshrl.u32 %v473, 7
        %v475 = vsub.s32 0, %v474
        %v476 = vrot.slane %v457, %v475
        %v477 = vmul.f32 %v437, %v476
        %v478 = vmul.f32 %v438, %v476
        %v479 = vmul.f32 %v439, %v476
        %v480 = vmul.f32 %v440, %v476
        %481 = vmatprep.subr.mxu0 0.0
        %482 = vmatpush1.xpose.msra.mxu0 0.0
        %483 = vmatprep.subr.mxu0 0.0
        %484 = vmatpush1.xpose.msra.mxu0 0.0
        %485 = vmatprep.subr.mxu0 0.0
        %486 = vmatpush1.xpose.msra.mxu0 0.0
        %487 = vmatprep.subr.mxu0 0.0
        %488 = vmatpush1.xpose.msra.mxu0 0.0
        %489 = vmatprep.subr.mxu0 0.0
        %490 = vmatpush1.xpose.msra.mxu0 0.0
        %491 = vmatprep.subr.mxu0 0.0
        %492 = vmatpush1.xpose.msra.mxu0 0.0
        %493 = vmatprep.subr.mxu0 0.0
        %494 = vmatpush1.xpose.msra.mxu0 0.0
        %495 = vmatprep.subr.mxu0 0.0
        %496 = vmatpush1.xpose.msra.mxu0 0.0
        %497 = vmatprep.subr.mxu0 0.0
        %498 = vmatpush1.xpose.msra.mxu0 0.0
        %499 = vmatprep.subr.mxu0 0.0
        %500 = vmatpush1.xpose.msra.mxu0 0.0
        %501 = vmatprep.subr.mxu0 0.0
        %502 = vmatpush1.xpose.msra.mxu0 0.0
        %503 = vmatprep.subr.mxu0 0.0
        %504 = vmatpush1.xpose.msra.mxu0 0.0
        %505 = vmatprep.subr.mxu0 0.0
        %506 = vmatpush1.xpose.msra.mxu0 0.0
        %507 = vmatprep.subr.mxu0 0.0
        %508 = vmatpush1.xpose.msra.mxu0 0.0
        %509 = vmatprep.subr.mxu0 0.0
        %510 = vmatpush1.xpose.msra.mxu0 %v423
        %511 = vmatprep.subr.mxu0 0.0
        %512 = vmatpush1.xpose.msra.mxu0 %v421
        %513 = vmatprep.subr.mxu0 0.0
        %514 = vmatpush2.xpose.msra.mxu0 0.0
        %515 = vmatprep.subr.mxu0 0.0
        %516 = vmatpush2.xpose.msra.mxu0 0.0
        %517 = vmatprep.subr.mxu0 0.0
        %518 = vmatpush2.xpose.msra.mxu0 0.0
        %519 = vmatprep.subr.mxu0 0.0
        %520 = vmatpush2.xpose.msra.mxu0 0.0
        %521 = vmatprep.subr.mxu0 0.0
        %522 = vmatpush2.xpose.msra.mxu0 0.0
        %523 = vmatprep.subr.mxu0 0.0
        %524 = vmatpush2.xpose.msra.mxu0 0.0
        %525 = vmatprep.subr.mxu0 0.0
        %526 = vmatpush2.xpose.msra.mxu0 0.0
        %527 = vmatprep.subr.mxu0 0.0
        %528 = vmatpush2.xpose.msra.mxu0 0.0
        %529 = vmatprep.subr.mxu0 0.0
        %530 = vmatpush2.xpose.msra.mxu0 0.0
        %531 = vmatprep.subr.mxu0 0.0
        %532 = vmatpush2.xpose.msra.mxu0 0.0
        %533 = vmatprep.subr.mxu0 0.0
        %534 = vmatpush2.xpose.msra.mxu0 0.0
        %535 = vmatprep.subr.mxu0 0.0
        %536 = vmatpush2.xpose.msra.mxu0 0.0
        %537 = vmatprep.subr.mxu0 0.0
        %538 = vmatpush2.xpose.msra.mxu0 0.0
        %539 = vmatprep.subr.mxu0 0.0
        %540 = vmatpush2.xpose.msra.mxu0 0.0
        %541 = vmatprep.subr.mxu0 0.0
        %542 = vmatpush2.xpose.msra.mxu0 0.0
        %543 = vmatprep.subr.mxu0 0.0
        %544 = vmatpush2.xpose.msra.mxu0 0.0
        %545 = vmatprep.mubr.f32.mxu0 0.0
        %546 = vmatmul.mubr.f32.gmra.mxu0 %v290
        %v547 = vpop.f32.mrf.mxu0
        %v548 = vadd.f32 0.0, %v547
        %v549 = vpop.f32.mrf.mxu0
        %550 = vmatprep.mubr.f32.mxu0 0.0
        %551 = vmatmul.mubr.f32.gmra.mxu0 %v291
        %v552 = vpop.f32.mrf.mxu0
        %v553 = vadd.f32 0.0, %v552
        %v554 = vpop.f32.mrf.mxu0
        %555 = vmatprep.mubr.f32.mxu0 0.0
        %556 = vmatmul.mubr.f32.gmra.mxu0 %v292
        %v557 = vpop.f32.mrf.mxu0
        %v558 = vadd.f32 0.0, %v557
        %v559 = vpop.f32.mrf.mxu0
        %560 = vmatprep.mubr.f32.mxu0 0.0
        %561 = vmatmul.mubr.f32.gmra.mxu0 %v293
        %v562 = vpop.f32.mrf.mxu0
        %v563 = vadd.f32 0.0, %v562
        %v564 = vpop.f32.mrf.mxu0
        %565 = vdwg.mxu0
        %v566 = vadd.f32 %v477, %v548
        %v567 = vadd.f32 %v478, %v553
        %v568 = vadd.f32 %v479, %v558
        %v569 = vadd.f32 %v480, %v563
        %vm570 = vcmask 130048
        %571 = vst.msk [vmem:[#allocation4] sm:$0xff] %vm570, %v566
        %572 = vst.msk [vmem:[#allocation4 + $0x8] sm:$0xff] %vm570, %v567
        %573 = vst.msk [vmem:[#allocation4 + $0x10] sm:$0xff] %vm570, %v568
        %574 = vst.msk [vmem:[#allocation4 + $0x18] sm:$0xff] %vm570, %v569
        %575 = vst.msk [vmem:[#allocation2] sm:$0xff] %vm434, %v400
        %576 = vst.msk [vmem:[#allocation2 + $0x8] sm:$0xff] %vm434, %v401
        %p577 = scmp.eq.s32.totalorder %s26, 1
        // Predicated region
        $region49: #{tpu_custom_call.1} parent=35 // pred_check
          %p578 = pneg %p577
        $region50: #{tpu_custom_call.1} parent=35 // pred_check_branch
          %580 = sbr.rel (%p578) target = $region52
        $region51: #{tpu_custom_call.1} parent=35 // pred_region
          %v581 = vld [vmem:[#allocation3] sm:$0xff]
          %v582 = vld [vmem:[#allocation3 + $0x8] sm:$0xff]
          %v583 = vrcp.pop %v581
          %v584 = vrcp.pop %v582
          %v585 = vld [vmem:[#allocation4] sm:$0xff]
          %v586 = vld [vmem:[#allocation4 + $0x8] sm:$0xff]
          %v587 = vld [vmem:[#allocation4 + $0x10] sm:$0xff]
          %v588 = vld [vmem:[#allocation4 + $0x18] sm:$0xff]
          %589 = vxpose.xlu0.b32.start [1/16] %v583, 128
          %590 = vxpose.xlu0.b32.cont [2/16] %v584, 128
          %591 = vxpose.xlu0.b32.cont [3/16] 0.0, 128
          %592 = vxpose.xlu0.b32.cont [4/16] 0.0, 128
          %593 = vxpose.xlu0.b32.cont [5/16] 0.0, 128
          %594 = vxpose.xlu0.b32.cont [6/16] 0.0, 128
          %595 = vxpose.xlu0.b32.cont [7/16] 0.0, 128
          %596 = vxpose.xlu0.b32.cont [8/16] 0.0, 128
          %597 = vxpose.xlu0.b32.cont [9/16] 0.0, 128
          %598 = vxpose.xlu0.b32.cont [10/16] 0.0, 128
          %599 = vxpose.xlu0.b32.cont [11/16] 0.0, 128
          %600 = vxpose.xlu0.b32.cont [12/16] 0.0, 128
          %601 = vxpose.xlu0.b32.cont [13/16] 0.0, 128
          %602 = vxpose.xlu0.b32.cont [14/16] 0.0, 128
          %603 = vxpose.xlu0.b32.cont [15/16] 0.0, 128
          %604 = vxpose.xlu0.b32.end [16/16] 0.0, 128
          %v605 = vpop.trf.xlu0
          %v606 = vpop.trf.xlu0
          %v607 = vpop.trf.xlu0
          %v608 = vpop.trf.xlu0
          %v609 = vpop.trf.xlu0
          %v610 = vpop.trf.xlu0
          %v611 = vpop.trf.xlu0
          %v612 = vpop.trf.xlu0
          %v613 = vpop.trf.xlu0
          %v614 = vpop.trf.xlu0
          %v615 = vpop.trf.xlu0
          %v616 = vpop.trf.xlu0
          %v617 = vpop.trf.xlu0
          %v618 = vpop.trf.xlu0
          %v619 = vpop.trf.xlu0
          %v620 = vpop.trf.xlu0
          %v621 = vlaneseq
          %v622 = vshrl.u32 %v621, 7
          %v623 = vsub.s32 0, %v622
          %v624 = vrot.slane %v605, %v623
          %v625 = vmul.f32 %v585, %v624
          %v626 = vmul.f32 %v586, %v624
          %v627 = vmul.f32 %v587, %v624
          %v628 = vmul.f32 %v588, %v624
          %629 = vst.msk [vmem:[%s275] sm:$0xff] %vm570, %v625
          %630 = vst.msk [vmem:[%s275 + $0x8] sm:$0xff] %vm570, %v626
          %631 = vst.msk [vmem:[%s275 + $0x10] sm:$0xff] %vm570, %v627
          %632 = vst.msk [vmem:[%s275 + $0x18] sm:$0xff] %vm570, %v628
        $region52: #{tpu_custom_call.1} parent=35 // pred_fallthru
          _
        %p633 = scmp.lt.s32.totalorder %s25, 1
        %s634 = scalar_select %p633, %s25, 1
        %s635 = smul.addr %s634, 4
        %s636 = smul.addr %s635, 8
        %s637 = scalar_lea.vmem %s4, %s636
        // Predicated region
        $region53: #{tpu_custom_call.1} parent=35 // pred_check
          %p638 = pneg %p149
        $region54: #{tpu_custom_call.1} parent=35 // pred_check_branch
          %640 = sbr.rel (%p638) target = $region56
        $region55: #{tpu_custom_call.1} parent=35 // pred_region
          _
        $region56: #{tpu_custom_call.1} parent=35 // pred_fallthru
          _
      $region36: #{tpu_custom_call.1} parent=5 // pred_fallthru
        _
      %p641 = scmp.le.s32.totalorder 2, %s16
      // Predicated region
      $region57: #{tpu_custom_call.1} parent=5 // pred_check
        %p642 = pneg %p641
      $region58: #{tpu_custom_call.1} parent=5 // pred_check_branch
        %644 = sbr.rel (%p642) target = $region60
      $region59: #{tpu_custom_call.1} parent=5 // pred_region
        %s645 = ssub.s32 %s16, 2
        // Predicated region
        $region61: #{tpu_custom_call.1} parent=59 // pred_check
          %p646 = pneg %p155
        $region62: #{tpu_custom_call.1} parent=59 // pred_check_branch
          %648 = sbr.rel (%p646) target = $region64
        $region63: #{tpu_custom_call.1} parent=59 // pred_region
          %p649 = scmp.lt.s32.totalorder %s27, 1
          %s650 = scalar_select %p649, %s27, 1
          %s651 = smul.addr %s650, 4
          %s652 = smul.addr %s651, 8
          %s653 = scalar_lea.vmem %s4, %s652
        $region64: #{tpu_custom_call.1} parent=59 // pred_fallthru
          _
      $region60: #{tpu_custom_call.1} parent=5 // pred_fallthru
        _
    $region6: #{tpu_custom_call.1} parent=1 // loop_footer
      %s20 = sadd.s32 1, %s16
    $region7: #{tpu_custom_call.1} parent=1 // loop_footer_branch
      %15 = sbr.rel target = $region3
    $region8: #{tpu_custom_call.1} parent=1 // loop_exit
      _
    %654 = vsyncpa [#allocation6], 1
    %s655 = scalar_lea.sflag [#allocation6], 1
    %656 = vsyncpa %s655, 1
    %657 = vsyncpa [#allocation8], 1
    %s658 = scalar_lea.sflag [#allocation8], 1
    %659 = vsyncpa %s658, 1

</llo_original>
